<compile_context>
chip_gen: v5e
topology: v5e:2x2
jax: 0.10.0
libtpu: 0.0.40
codegen_flags: <defaults>
</compile_context>

<pallas_src>
import jax
import jax.numpy as jnp
from jax.experimental import pallas as pl
from jax.experimental.pallas import tpu as pltpu


# ----------------------------------------------------------------------------
# Tile selection helpers
# ----------------------------------------------------------------------------
def _pick_tile(dim, target, align):
    """Largest multiple of `align` <= target that divides `dim`; else full dim."""
    if dim <= target:
        return dim
    t = (target // align) * align
    while t >= align:
        if dim % t == 0:
            return t
        t -= align
    return dim  # fallback: whole axis (always satisfies the (8,128) rule)


# ----------------------------------------------------------------------------
# Kernel A: fused cos_sim matmul + epilogue.
#   grid = (B//tm, E//tk), K (embedding) innermost/"arbitrary", rows "parallel".
#   Outputs per row-block i:
#     d    (tm, B)  : txt @ img.T rows (f32 accumulation)
#     key  (tm, B)  : where(eye, 0, -d)   -> ascending-sort key == descending masked d
#     pos  (tm, 1)  : diag(d) rows        -> positive logits / align
#     urow (tm, 1)  : sum_j exp(key)      -> partial sums for "uniform"
# ----------------------------------------------------------------------------
def _make_sim_stats_kernel(B, tm):
    def kernel(txt_ref, img_ref, d_ref, key_ref, pos_ref, urow_ref, acc_ref):
        # Hoist ALL grid queries to the kernel top level (never inside pl.when).
        i = pl.program_id(0)
        k = pl.program_id(1)
        last_k = pl.num_programs(1) - 1

        @pl.when(k == 0)
        def _():
            acc_ref[...] = jnp.zeros_like(acc_ref)

        # (tm, tk) x (B, tk)^T on the MXU, f32 accumulation.
        acc_ref[...] += jax.lax.dot_general(
            txt_ref[...], img_ref[...],
            dimension_numbers=(((1,), (1,)), ((), ())),
            preferred_element_type=jnp.float32)

        @pl.when(k == last_k)
        def _():
            d = acc_ref[...]                                        # (tm, B) f32
            row = jax.lax.broadcasted_iota(jnp.int32, (tm, B), 0) + i * tm
            col = jax.lax.broadcasted_iota(jnp.int32, (tm, B), 1)
            eye = row == col
            neg_masked = jnp.where(eye, 0.0, -d)                    # diag -> 0
            d_ref[...] = d
            key_ref[...] = neg_masked
            pos_ref[...] = jnp.sum(jnp.where(eye, d, 0.0), axis=1, keepdims=True)
            # torch: (d - eye*d).mul(-1).exp() -> offdiag exp(-d), diag exp(0)=1
            urow_ref[...] = jnp.sum(jnp.exp(neg_masked), axis=1, keepdims=True)

    return kernel


def sim_stats_pallas(txt, img, matmul_dtype=jnp.bfloat16):
    B, E = txt.shape
    tm = _pick_tile(B, 256, 8)     # keeps VMEM modest even on v7x (64 MiB)
    tk = _pick_tile(E, 512, 128)
    n_m, n_k = B // tm, E // tk

    txt_c = txt.astype(matmul_dtype)
    img_c = img.astype(matmul_dtype)

    grid_spec = pltpu.PrefetchScalarGridSpec(
        num_scalar_prefetch=0,
        grid=(n_m, n_k),
        in_specs=[pl.BlockSpec((tm, tk), lambda i, k: (i, k)),   # txt rows
                  pl.BlockSpec((B, tk), lambda i, k: (0, k))],   # all img rows
        out_specs=(pl.BlockSpec((tm, B), lambda i, k: (i, 0)),   # d
                   pl.BlockSpec((tm, B), lambda i, k: (i, 0)),   # sort key
                   pl.BlockSpec((tm, 1), lambda i, k: (i, 0)),   # pos (diag)
                   pl.BlockSpec((tm, 1), lambda i, k: (i, 0))),  # urow
        scratch_shapes=[pltpu.VMEM((tm, B), jnp.float32)])

    return pl.pallas_call(
        _make_sim_stats_kernel(B, tm),
        grid_spec=grid_spec,
        out_shape=(jax.ShapeDtypeStruct((B, B), jnp.float32),
                   jax.ShapeDtypeStruct((B, B), jnp.float32),
                   jax.ShapeDtypeStruct((B, 1), jnp.float32),
                   jax.ShapeDtypeStruct((B, 1), jnp.float32)),
        compiler_params=pltpu.CompilerParams(
            dimension_semantics=("parallel", "arbitrary")),
    )(txt_c, img_c)


# ----------------------------------------------------------------------------
# Kernel B: fused dual-direction masked-LSE cross-entropy (label 0).
#   neg_t2i    (B, B): row i = similarities d[i, :] sorted by descending masked d[i, :]
#   neg_i2t_cm (B, B): col j = similarities d[:, j] sorted by descending masked d[:, j]
#   (column-major so the i2t branch needs no transpose anywhere)
# ----------------------------------------------------------------------------
def _make_loss_kernel(B, margin, lamda):
    inv_l = float(1.0 / lamda)
    mgn = float(margin)
    NEG = -1e30

    def kernel(nneg_ref, posc_ref, posr_ref, nt_ref, nicm_ref, loss_ref):
        num_negs = nneg_ref[0]

        # ---- t2i (row-major: query along sublanes, rank along lanes) ----
        pos_c = posc_ref[...] * inv_l                                  # (B, 1)
        nt = (nt_ref[...] + mgn) * inv_l                               # (B, B)
        colid = jax.lax.broadcasted_iota(jnp.int32, (B, B), 1)
        nt = jnp.where(colid < num_negs, nt, NEG)
        m_t = jnp.maximum(jnp.max(nt, axis=1, keepdims=True), pos_c)   # (B, 1)
        se_t = jnp.exp(pos_c - m_t) + jnp.sum(jnp.exp(nt - m_t), axis=1, keepdims=True)
        ce_t = (m_t + jnp.log(se_t)) - pos_c                           # (B, 1)
        sum_t = jnp.sum(ce_t, axis=0, keepdims=True)                   # (1, 1)

        # ---- i2t (column-major: rank along sublanes, query along lanes) ----
        pos_r = posr_ref[...] * inv_l                                  # (1, B)
        nc = (nicm_ref[...] + mgn) * inv_l                             # (B, B)
        rowid = jax.lax.broadcasted_iota(jnp.int32, (B, B), 0)
        nc = jnp.where(rowid < num_negs, nc, NEG)
        m_i = jnp.maximum(jnp.max(nc, axis=0, keepdims=True), pos_r)   # (1, B)
        se_i = jnp.exp(pos_r - m_i) + jnp.sum(jnp.exp(nc - m_i), axis=0, keepdims=True)
        ce_i = (m_i + jnp.log(se_i)) - pos_r                           # (1, B)
        sum_i = jnp.sum(ce_i, axis=1, keepdims=True)                   # (1, 1)

        loss_ref[...] = (sum_t + sum_i) / float(2 * B)                 # (t2i + i2t)/2, mean CE

    return kernel


def fused_loss_pallas(pos_col, pos_row, neg_t2i, neg_i2t_cm, num_negs, margin, lamda):
    B = pos_col.shape[0]
    nneg = jnp.reshape(num_negs.astype(jnp.int32), (1,))
    out = pl.pallas_call(
        _make_loss_kernel(B, margin, lamda),
        in_specs=[pl.BlockSpec(memory_space=pltpu.MemorySpace.SMEM),   # num_negs
                  pl.BlockSpec(memory_space=pltpu.MemorySpace.VMEM),   # pos (B,1)
                  pl.BlockSpec(memory_space=pltpu.MemorySpace.VMEM),   # pos (1,B)
                  pl.BlockSpec(memory_space=pltpu.MemorySpace.VMEM),   # neg_t2i
                  pl.BlockSpec(memory_space=pltpu.MemorySpace.VMEM)],  # neg_i2t (col-major)
        out_specs=pl.BlockSpec(memory_space=pltpu.MemorySpace.VMEM),
        out_shape=jax.ShapeDtypeStruct((1, 1), jnp.float32),
    )(nneg, pos_col, pos_row, neg_t2i, neg_i2t_cm)
    return out[0, 0]


# ----------------------------------------------------------------------------
# Module-equivalent forward
# ----------------------------------------------------------------------------
def make_contrastive_loss(scale, const_num, margin, lamda=0.01, acc_mode="acc",
                          matmul_dtype=jnp.bfloat16):
    def forward(img, txt, txt_lens):
        del txt_lens  # unused by the reference forward as well
        B = txt.shape[0]

        # Kernel A: cos_sim + diag + uniform partials + sort key, one pallas_call.
        d, key, pos, urow = sim_stats_pallas(txt, img, matmul_dtype)

        # num_negs: align/uniform are transpose-invariant, so t2i and i2t agree.
        if acc_mode == "acc":
            align = jnp.sum(pos) / B
            uniform = jnp.sum(urow) / (B * B)
            tmp = align + uniform
            nn = jnp.cos(tmp ** scale) * B                        # scalar glue (plain XLA)
            num_negs = jnp.maximum(nn.astype(jnp.int32) + 1, 1)   # int() truncates
            num_negs = jnp.minimum(num_negs, B - 1)
        elif acc_mode == "constant":
            num_negs = jnp.int32(const_num if const_num else 1)
        else:  # "random"
            # TODO(synk): torch draws host-side np.random.randint per call; fixed here.
            num_negs = jnp.int32(max(1, min(const_num, B - 1)))

        # Sort glue (no Pallas TPU sort primitive): ascending on key == descending on
        # masked d; the carried payload is the ORIGINAL similarity, exactly matching
        # torch's masked_fill -> sort -> gather(keys) -> q·key recompute.
        neg_t2i = jax.lax.sort((key, d), dimension=1, num_keys=1)[1]      # (B, B) rows
        neg_i2t_cm = jax.lax.sort((key, d), dimension=0, num_keys=1)[1]   # (B, B) cols
        pos_row = jnp.reshape(pos, (1, B))        # tiny B-float reshape, no B×B transpose

        # Kernel B: both directions' cross-entropy fused into one call.
        loss = fused_loss_pallas(pos, pos_row, neg_t2i, neg_i2t_cm,
                                 num_negs, margin, lamda)
        return loss, (num_negs, num_negs)

    return jax.jit(forward)


if __name__ == "__main__":
    key = jax.random.PRNGKey(0)
    B, E = 8, 32
    k_img, k_txt = jax.random.split(key)
    img = jax.random.normal(k_img, (B, E), dtype=jnp.float32)
    txt = jax.random.normal(k_txt, (B, E), dtype=jnp.float32)
    # VSE embeddings are typically L2-normalized; keeps cos_sim in [-1, 1].
    img = img / jnp.linalg.norm(img, axis=-1, keepdims=True)
    txt = txt / jnp.linalg.norm(txt, axis=-1, keepdims=True)
    txt_lens = jnp.full((B,), 8, dtype=jnp.int32)

    fwd = make_contrastive_loss(scale=2.0, const_num=3, margin=0.2,
                                lamda=0.01, acc_mode="acc")
    loss, num_negs = fwd(img, txt, txt_lens)
    jax.block_until_ready(loss)
    print("KERNEL_OK")
</pallas_src>

<mosaic_0001>
module attributes {stable_mosaic.version = 11 : i64} {
  func.func @kernel(%arg0: i32, %arg1: i32, %arg2: memref<8x32xbf16, #tpu.memory_space<vmem>>, %arg3: memref<8x32xbf16, #tpu.memory_space<vmem>>, %arg4: memref<8x8xf32, #tpu.memory_space<vmem>>, %arg5: memref<8x8xf32, #tpu.memory_space<vmem>>, %arg6: memref<8x1xf32, #tpu.memory_space<vmem>>, %arg7: memref<8x1xf32, #tpu.memory_space<vmem>>, %arg8: memref<8x8xf32, #tpu.memory_space<vmem>>) attributes {dimension_semantics = [#tpu.dimension_semantics<parallel>, #tpu.dimension_semantics<arbitrary>], iteration_bounds = array<i64: 1, 1>, scalar_prefetch = 0 : i64, scratch_operands = 1 : i64, tpu.core_type = #tpu.core_type<tc>, window_params = [{transform_indices = @transform_0, window_bounds = array<i64: 8, 32>}, {transform_indices = @transform_1, window_bounds = array<i64: 8, 32>}, {transform_indices = @transform_2, window_bounds = array<i64: 8, 8>}, {transform_indices = @transform_3, window_bounds = array<i64: 8, 8>}, {transform_indices = @transform_4, window_bounds = array<i64: 8, 1>}, {transform_indices = @transform_5, window_bounds = array<i64: 8, 1>}]} {
    %c0_i32 = arith.constant 0 : i32
    %0 = arith.cmpi eq, %arg1, %c0_i32 : i32
    %1 = arith.extui %0 : i1 to i32
    %c0_i32_0 = arith.constant 0 : i32
    %2 = arith.cmpi ne, %1, %c0_i32_0 : i32
    scf.if %2 {
      %cst_10 = arith.constant 0.000000e+00 : f32
      %12 = vector.broadcast %cst_10 : f32 to vector<8x8xf32>
      %c0_11 = arith.constant 0 : index
      %c0_12 = arith.constant 0 : index
      %13 = vector.load %arg8[%c0_11, %c0_12] : memref<8x8xf32, #tpu.memory_space<vmem>>, vector<8x8xf32>
      tpu.vector_store %arg8[%c0_11, %c0_12], %12 {strides = array<i32>} : memref<8x8xf32, #tpu.memory_space<vmem>>, vector<8x8xf32>,
    } else {
    }
    %c0 = arith.constant 0 : index
    %c0_1 = arith.constant 0 : index
    %3 = vector.load %arg8[%c0, %c0_1] : memref<8x8xf32, #tpu.memory_space<vmem>>, vector<8x8xf32>
    %c0_2 = arith.constant 0 : index
    %c0_3 = arith.constant 0 : index
    %4 = vector.load %arg2[%c0_2, %c0_3] : memref<8x32xbf16, #tpu.memory_space<vmem>>, vector<8x32xbf16>
    %c0_4 = arith.constant 0 : index
    %c0_5 = arith.constant 0 : index
    %5 = vector.load %arg3[%c0_4, %c0_5] : memref<8x32xbf16, #tpu.memory_space<vmem>>, vector<8x32xbf16>
    %cst = arith.constant dense<0.000000e+00> : vector<8x8xf32>
    %6 = tpu.matmul %4, %5, %cst {dimension_numbers = #tpu.dot_dimension_numbers<[1], [1], [0], [0], [0, 0, 1, 0], [], []>} : vector<8x32xbf16>, vector<8x32xbf16>, vector<8x8xf32> -> vector<8x8xf32>
    %7 = arith.addf %3, %6 : vector<8x8xf32>
    %c0_6 = arith.constant 0 : index
    %c0_7 = arith.constant 0 : index
    %8 = vector.load %arg8[%c0_6, %c0_7] : memref<8x8xf32, #tpu.memory_space<vmem>>, vector<8x8xf32>
    tpu.vector_store %arg8[%c0_6, %c0_7], %7 {strides = array<i32>} : memref<8x8xf32, #tpu.memory_space<vmem>>, vector<8x8xf32>,
    %c0_i32_8 = arith.constant 0 : i32
    %9 = arith.cmpi eq, %arg1, %c0_i32_8 : i32
    %10 = arith.extui %9 : i1 to i32
    %c0_i32_9 = arith.constant 0 : i32
    %11 = arith.cmpi ne, %10, %c0_i32_9 : i32
    scf.if %11 {
      %c0_10 = arith.constant 0 : index
      %c0_11 = arith.constant 0 : index
      %12 = vector.load %arg8[%c0_10, %c0_11] : memref<8x8xf32, #tpu.memory_space<vmem>>, vector<8x8xf32>
      %13 = tpu.iota {dimensions = array<i32: 0>} : vector<8x8xi32>
      %c8_i32 = arith.constant 8 : i32
      %14 = arith.muli %arg0, %c8_i32 : i32
      %15 = vector.broadcast %14 : i32 to vector<8x8xi32>
      %16 = arith.addi %13, %15 : vector<8x8xi32>
      %17 = tpu.iota {dimensions = array<i32: 1>} : vector<8x8xi32>
      %18 = arith.cmpi eq, %16, %17 : vector<8x8xi32>
      %cst_12 = arith.constant 0.000000e+00 : f32
      %19 = vector.broadcast %cst_12 : f32 to vector<8x8xf32>
      %20 = arith.subf %19, %12 : vector<8x8xf32>
      %cst_13 = arith.constant 0.000000e+00 : f32
      %21 = vector.broadcast %cst_13 : f32 to vector<8x8xf32>
      %22 = arith.select %18, %21, %20 : vector<8x8xi1>, vector<8x8xf32>
      %c0_14 = arith.constant 0 : index
      %c0_15 = arith.constant 0 : index
      %23 = vector.load %arg4[%c0_14, %c0_15] : memref<8x8xf32, #tpu.memory_space<vmem>>, vector<8x8xf32>
      tpu.vector_store %arg4[%c0_14, %c0_15], %12 {strides = array<i32>} : memref<8x8xf32, #tpu.memory_space<vmem>>, vector<8x8xf32>,
      %c0_16 = arith.constant 0 : index
      %c0_17 = arith.constant 0 : index
      %24 = vector.load %arg5[%c0_16, %c0_17] : memref<8x8xf32, #tpu.memory_space<vmem>>, vector<8x8xf32>
      tpu.vector_store %arg5[%c0_16, %c0_17], %22 {strides = array<i32>} : memref<8x8xf32, #tpu.memory_space<vmem>>, vector<8x8xf32>,
      %cst_18 = arith.constant 0.000000e+00 : f32
      %25 = vector.broadcast %cst_18 : f32 to vector<8x8xf32>
      %26 = arith.select %18, %12, %25 : vector<8x8xi1>, vector<8x8xf32>
      %cst_19 = arith.constant dense<0.000000e+00> : vector<8xf32>
      %27 = vector.multi_reduction <add>, %26, %cst_19 [1] : vector<8x8xf32> to vector<8xf32>
      %28 = vector.shape_cast %27 : vector<8xf32> to vector<8x1xf32>
      %c0_20 = arith.constant 0 : index
      %c0_21 = arith.constant 0 : index
      %29 = vector.load %arg6[%c0_20, %c0_21] : memref<8x1xf32, #tpu.memory_space<vmem>>, vector<8x1xf32>
      tpu.vector_store %arg6[%c0_20, %c0_21], %28 {strides = array<i32>} : memref<8x1xf32, #tpu.memory_space<vmem>>, vector<8x1xf32>,
      %30 = math.exp %22 : vector<8x8xf32>
      %cst_22 = arith.constant dense<0.000000e+00> : vector<8xf32>
      %31 = vector.multi_reduction <add>, %30, %cst_22 [1] : vector<8x8xf32> to vector<8xf32>
      %32 = vector.shape_cast %31 : vector<8xf32> to vector<8x1xf32>
      %c0_23 = arith.constant 0 : index
      %c0_24 = arith.constant 0 : index
      %33 = vector.load %arg7[%c0_23, %c0_24] : memref<8x1xf32, #tpu.memory_space<vmem>>, vector<8x1xf32>
      tpu.vector_store %arg7[%c0_23, %c0_24], %32 {strides = array<i32>} : memref<8x1xf32, #tpu.memory_space<vmem>>, vector<8x1xf32>,
    } else {
    }
    return
  }
  func.func @transform_0(%arg0: i32, %arg1: i32) -> (i32, i32) {
    %c0_i32 = arith.constant 0 : i32
    return %arg0, %arg1 : i32, i32
  }
  func.func @transform_1(%arg0: i32, %arg1: i32) -> (i32, i32) {
    %c0_i32 = arith.constant 0 : i32
    %c0_i32_0 = arith.constant 0 : i32
    return %c0_i32, %arg1 : i32, i32
  }
  func.func @transform_2(%arg0: i32, %arg1: i32) -> (i32, i32) {
    %c0_i32 = arith.constant 0 : i32
    %c0_i32_0 = arith.constant 0 : i32
    return %arg0, %c0_i32 : i32, i32
  }
  func.func @transform_3(%arg0: i32, %arg1: i32) -> (i32, i32) {
    %c0_i32 = arith.constant 0 : i32
    %c0_i32_0 = arith.constant 0 : i32
    return %arg0, %c0_i32 : i32, i32
  }
  func.func @transform_4(%arg0: i32, %arg1: i32) -> (i32, i32) {
    %c0_i32 = arith.constant 0 : i32
    %c0_i32_0 = arith.constant 0 : i32
    return %arg0, %c0_i32 : i32, i32
  }
  func.func @transform_5(%arg0: i32, %arg1: i32) -> (i32, i32) {
    %c0_i32 = arith.constant 0 : i32
    %c0_i32_0 = arith.constant 0 : i32
    return %arg0, %c0_i32 : i32, i32
  }
}

module attributes {stable_mosaic.version = 11 : i64} {
  func.func @kernel(%arg0: memref<1xi32, #tpu.memory_space<smem>>, %arg1: memref<8x1xf32, #tpu.memory_space<vmem>>, %arg2: memref<1x8xf32, #tpu.memory_space<vmem>>, %arg3: memref<8x8xf32, #tpu.memory_space<vmem>>, %arg4: memref<8x8xf32, #tpu.memory_space<vmem>>, %arg5: memref<1x1xf32, #tpu.memory_space<vmem>>) attributes {dimension_semantics = [], scalar_prefetch = 0 : i64, scratch_operands = 0 : i64, tpu.core_type = #tpu.core_type<tc>} {
    %c0 = arith.constant 0 : index
    %0 = memref.load %arg0[%c0] : memref<1xi32, #tpu.memory_space<smem>>
    %c0_0 = arith.constant 0 : index
    %c0_1 = arith.constant 0 : index
    %1 = vector.load %arg1[%c0_0, %c0_1] : memref<8x1xf32, #tpu.memory_space<vmem>>, vector<8x1xf32>
    %cst = arith.constant 1.000000e+02 : f32
    %2 = vector.broadcast %cst : f32 to vector<8x1xf32>
    %3 = arith.mulf %1, %2 : vector<8x1xf32>
    %c0_2 = arith.constant 0 : index
    %c0_3 = arith.constant 0 : index
    %4 = vector.load %arg3[%c0_2, %c0_3] : memref<8x8xf32, #tpu.memory_space<vmem>>, vector<8x8xf32>
    %cst_4 = arith.constant 2.000000e-01 : f32
    %5 = vector.broadcast %cst_4 : f32 to vector<8x8xf32>
    %6 = arith.addf %4, %5 : vector<8x8xf32>
    %cst_5 = arith.constant 1.000000e+02 : f32
    %7 = vector.broadcast %cst_5 : f32 to vector<8x8xf32>
    %8 = arith.mulf %6, %7 : vector<8x8xf32>
    %9 = tpu.iota {dimensions = array<i32: 1>} : vector<8x8xi32>
    %10 = vector.broadcast %0 : i32 to vector<8x8xi32>
    %11 = arith.cmpi slt, %9, %10 : vector<8x8xi32>
    %cst_6 = arith.constant -1.000000e+30 : f32
    %12 = vector.broadcast %cst_6 : f32 to vector<8x8xf32>
    %13 = arith.select %11, %8, %12 : vector<8x8xi1>, vector<8x8xf32>
    %cst_7 = arith.constant dense<0xFF800000> : vector<8xf32>
    %14 = vector.multi_reduction <maximumf>, %13, %cst_7 [1] : vector<8x8xf32> to vector<8xf32>
    %15 = vector.shape_cast %14 : vector<8xf32> to vector<8x1xf32>
    %16 = arith.maximumf %15, %3 : vector<8x1xf32>
    %17 = arith.subf %3, %16 : vector<8x1xf32>
    %18 = math.exp %17 : vector<8x1xf32>
    %19 = vector.broadcast %16 : vector<8x1xf32> to vector<8x8xf32>
    %20 = arith.subf %13, %19 : vector<8x8xf32>
    %21 = math.exp %20 : vector<8x8xf32>
    %cst_8 = arith.constant dense<0.000000e+00> : vector<8xf32>
    %22 = vector.multi_reduction <add>, %21, %cst_8 [1] : vector<8x8xf32> to vector<8xf32>
    %23 = vector.shape_cast %22 : vector<8xf32> to vector<8x1xf32>
    %24 = arith.addf %18, %23 : vector<8x1xf32>
    %25 = math.log %24 : vector<8x1xf32>
    %26 = arith.addf %16, %25 : vector<8x1xf32>
    %27 = arith.subf %26, %3 : vector<8x1xf32>
    %cst_9 = arith.constant dense<0.000000e+00> : vector<1xf32>
    %28 = vector.multi_reduction <add>, %27, %cst_9 [0] : vector<8x1xf32> to vector<1xf32>
    %29 = vector.shape_cast %28 : vector<1xf32> to vector<1x1xf32>
    %c0_10 = arith.constant 0 : index
    %c0_11 = arith.constant 0 : index
    %30 = vector.load %arg2[%c0_10, %c0_11] : memref<1x8xf32, #tpu.memory_space<vmem>>, vector<1x8xf32>
    %cst_12 = arith.constant 1.000000e+02 : f32
    %31 = vector.broadcast %cst_12 : f32 to vector<1x8xf32>
    %32 = arith.mulf %30, %31 : vector<1x8xf32>
    %c0_13 = arith.constant 0 : index
    %c0_14 = arith.constant 0 : index
    %33 = vector.load %arg4[%c0_13, %c0_14] : memref<8x8xf32, #tpu.memory_space<vmem>>, vector<8x8xf32>
    %cst_15 = arith.constant 2.000000e-01 : f32
    %34 = vector.broadcast %cst_15 : f32 to vector<8x8xf32>
    %35 = arith.addf %33, %34 : vector<8x8xf32>
    %cst_16 = arith.constant 1.000000e+02 : f32
    %36 = vector.broadcast %cst_16 : f32 to vector<8x8xf32>
    %37 = arith.mulf %35, %36 : vector<8x8xf32>
    %38 = tpu.iota {dimensions = array<i32: 0>} : vector<8x8xi32>
    %39 = vector.broadcast %0 : i32 to vector<8x8xi32>
    %40 = arith.cmpi slt, %38, %39 : vector<8x8xi32>
    %cst_17 = arith.constant -1.000000e+30 : f32
    %41 = vector.broadcast %cst_17 : f32 to vector<8x8xf32>
    %42 = arith.select %40, %37, %41 : vector<8x8xi1>, vector<8x8xf32>
    %cst_18 = arith.constant dense<0xFF800000> : vector<8xf32>
    %43 = vector.multi_reduction <maximumf>, %42, %cst_18 [0] : vector<8x8xf32> to vector<8xf32>
    %44 = vector.shape_cast %43 : vector<8xf32> to vector<1x8xf32>
    %45 = arith.maximumf %44, %32 : vector<1x8xf32>
    %46 = arith.subf %32, %45 : vector<1x8xf32>
    %47 = math.exp %46 : vector<1x8xf32>
    %48 = vector.broadcast %45 : vector<1x8xf32> to vector<8x8xf32>
    %49 = arith.subf %42, %48 : vector<8x8xf32>
    %50 = math.exp %49 : vector<8x8xf32>
    %cst_19 = arith.constant dense<0.000000e+00> : vector<8xf32>
    %51 = vector.multi_reduction <add>, %50, %cst_19 [0] : vector<8x8xf32> to vector<8xf32>
    %52 = vector.shape_cast %51 : vector<8xf32> to vector<1x8xf32>
    %53 = arith.addf %47, %52 : vector<1x8xf32>
    %54 = math.log %53 : vector<1x8xf32>
    %55 = arith.addf %45, %54 : vector<1x8xf32>
    %56 = arith.subf %55, %32 : vector<1x8xf32>
    %cst_20 = arith.constant dense<0.000000e+00> : vector<1xf32>
    %57 = vector.multi_reduction <add>, %56, %cst_20 [1] : vector<1x8xf32> to vector<1xf32>
    %58 = vector.shape_cast %57 : vector<1xf32> to vector<1x1xf32>
    %59 = arith.addf %29, %58 : vector<1x1xf32>
    %cst_21 = arith.constant 1.600000e+01 : f32
    %60 = vector.broadcast %cst_21 : f32 to vector<1x1xf32>
    %61 = arith.divf %59, %60 : vector<1x1xf32>
    %c0_22 = arith.constant 0 : index
    %c0_23 = arith.constant 0 : index
    %62 = vector.load %arg5[%c0_22, %c0_23] : memref<1x1xf32, #tpu.memory_space<vmem>>, vector<1x1xf32>
    tpu.vector_store %arg5[%c0_22, %c0_23], %61 {strides = array<i32>} : memref<1x1xf32, #tpu.memory_space<vmem>>, vector<1x1xf32>,
    return
  }
}

</mosaic_0001>

<llo_original>
// kernel: forward.2
$region0: #{forward.2}
  #allocation0 [shape = 'u32[]', space=smem, size = 0x4, offset = 0x4, fixed_abs, tag = 'smem constant byte address 0x4 - core index']
  #allocation1 [shape = 'u32[72,128]{1,0:T(1,128)}', space=vmem, size = 0x9000, scoped, tag = 'internal scratch']
  #allocation2 [shape = 'f32[8,8]{1,0:T(8,128)}', space=vmem, size = 0x1000, scoped, tag = 'scratch operand']
  %s0 = inlined_call_operand.vmem [shape: bf16[8,32], index: 0, kind: input, shape index: {}]
  %s1 = inlined_call_operand.vmem [shape: bf16[8,32], index: 1, kind: input, shape index: {}]
  %s2 = inlined_call_operand.vmem [shape: f32[8,8], index: 2, kind: output, shape index: {0}]
  %s3 = inlined_call_operand.vmem [shape: f32[8,8], index: 3, kind: output, shape index: {1}]
  %s4 = inlined_call_operand.vmem [shape: f32[8,1], index: 4, kind: output, shape index: {2}]
  %s5 = inlined_call_operand.vmem [shape: f32[8,1], index: 5, kind: output, shape index: {3}]
  %6 = xla_tuple %s2, %s3, %s4, %s5
  %s7 = sld [smem:[#allocation0]]
  $region50: #{forward.2} parent=0
    _
  %s9 = ssub.s32 1, %s7
  %s10 = scalar_select 0, %s9, %s7
  // Predicated region
  $region2: #{forward.2} parent=0 // pred_check
    _
  $region3: #{forward.2} parent=0 // pred_check_branch
    %12 = sbr.rel (0) target = $region5
  $region4: #{forward.2} parent=0 // pred_region
    _
  $region5: #{forward.2} parent=0 // pred_fallthru
    _
  // Predicated region
  $region6: #{forward.2} parent=0 // pred_check
    _
  $region7: #{forward.2} parent=0 // pred_check_branch
    %14 = sbr.rel (0) target = $region9
  $region8: #{forward.2} parent=0 // pred_region
    _
  $region9: #{forward.2} parent=0 // pred_fallthru
    _
  %p16 = scmp.eq.s32.totalorder 0, 0
  // Predicated region
  $region10: #{forward.2} parent=0 // pred_check
    %p17 = pneg %p16
  $region11: #{forward.2} parent=0 // pred_check_branch
    %19 = sbr.rel (%p17) target = $region13
  $region12: #{forward.2} parent=0 // pred_region
    %vm20 = vcmask 64512
    %21 = vst.msk [vmem:[#allocation2] sm:$0xff] %vm20, 0.0
  $region13: #{forward.2} parent=0 // pred_fallthru
    _
  %v22 = vld [vmem:[#allocation2] sm:$0xff]
  %v23 = vld [vmem:[%s0] sm:$0xf]
  %v24 = vld [vmem:[%s1] sm:$0xf]
  %vm25 = vcmask 261120
  %v27 = vsel %vm25, %v23, 0
  %v30 = vsel %vm25, %v24, 0
  %32 = vmatpush.bf16.xpose.msra.mxu0 0
  %33 = vmatpush.bf16.xpose.msra.mxu0 0
  %34 = vmatpush.bf16.xpose.msra.mxu0 0
  %35 = vmatpush.bf16.xpose.msra.mxu0 0
  %36 = vmatpush.bf16.xpose.msra.mxu0 0
  %37 = vmatpush.bf16.xpose.msra.mxu0 0
  %38 = vmatpush.bf16.xpose.msra.mxu0 0
  %39 = vmatpush.bf16.xpose.msra.mxu0 %v30
  %40 = vmatmul.bf16.gmra.mxu0 %v27
  %v41 = vpop.f32.mrf.mxu0
  %v42 = vadd.f32 0.0, %v41
  %v43 = vpop.f32.mrf.mxu0
  %44 = vdwg.mxu0
  %v45 = vadd.f32 %v22, %v42
  %vm46 = vcmask 64512
  %47 = vst.msk [vmem:[#allocation2] sm:$0xff] %vm46, %v45
  // Predicated region
  $region14: #{forward.2} parent=0 // pred_check
    %p48 = pneg %p16
  $region15: #{forward.2} parent=0 // pred_check_branch
    %50 = sbr.rel (%p48) target = $region17
  $region16: #{forward.2} parent=0 // pred_region
    %v51 = vld [vmem:[#allocation2] sm:$0xff]
    %v52 = vlaneseq
    %v53 = vshrl.u32 %v52, 7
    %s54 = smul.u32 0, 8
    %v55 = vstv %s54
    %v56 = vadd.s32 %v53, %v55
    %v57 = vlaneseq
    %v58 = vand.u32 %v57, 127
    %vm59 = vcmp.eq.s32.totalorder %v56, %v58
    %v60 = vsub.f32 0.0, %v51
    %v61 = vsel %vm59, 0.0, %v60
    %62 = vst.msk [vmem:[%s2] sm:$0xff] %vm46, %v51
    %63 = vst.msk [vmem:[%s3] sm:$0xff] %vm46, %v61
    %v64 = vsel %vm59, %v51, 0.0
    %v65 = vsel %vm46, %v64, 0.0
    %66 = vadd.xlane.f32.xlu0 %v65
    %v67 = vpop.xlane.xlu0 %66
    %vm68 = vcmask 7168
    %69 = vst.msk [vmem:[%s4] sm:$0xff] %vm68, %v67
    %v70 = vmul.f32 %v61, 1.442695
    %v71 = vpow.pop %v70
    %v72 = vsel %vm46, %v71, 0.0
    %73 = vadd.xlane.f32.xlu0 %v72
    %v74 = vpop.xlane.xlu0 %73
    %75 = vst.msk [vmem:[%s5] sm:$0xff] %vm68, %v74
  $region17: #{forward.2} parent=0 // pred_fallthru
    _
  // Predicated region
  $region18: #{forward.2} parent=0 // pred_check
    _
  $region19: #{forward.2} parent=0 // pred_check_branch
    %77 = sbr.rel (0) target = $region21
  $region20: #{forward.2} parent=0 // pred_region
    _
  $region21: #{forward.2} parent=0 // pred_fallthru
    _
  // Predicated region
  $region22: #{forward.2} parent=0 // pred_check
    _
  $region23: #{forward.2} parent=0 // pred_check_branch
    %79 = sbr.rel (0) target = $region25
  $region24: #{forward.2} parent=0 // pred_region
    _
  $region25: #{forward.2} parent=0 // pred_fallthru
    _
  // Predicated region
  $region26: #{forward.2} parent=0 // pred_check
    _
  $region27: #{forward.2} parent=0 // pred_check_branch
    %81 = sbr.rel (0) target = $region29
  $region28: #{forward.2} parent=0 // pred_region
    _
  $region29: #{forward.2} parent=0 // pred_fallthru
    _
  // Predicated region
  $region30: #{forward.2} parent=0 // pred_check
    _
  $region31: #{forward.2} parent=0 // pred_check_branch
    %83 = sbr.rel (0) target = $region33
  $region32: #{forward.2} parent=0 // pred_region
    _
  $region33: #{forward.2} parent=0 // pred_fallthru
    _
  // Predicated region
  $region34: #{forward.2} parent=0 // pred_check
    _
  $region35: #{forward.2} parent=0 // pred_check_branch
    %85 = sbr.rel (0) target = $region37
  $region36: #{forward.2} parent=0 // pred_region
    _
  $region37: #{forward.2} parent=0 // pred_fallthru
    _
  // Predicated region
  $region38: #{forward.2} parent=0 // pred_check
    _
  $region39: #{forward.2} parent=0 // pred_check_branch
    %87 = sbr.rel (0) target = $region41
  $region40: #{forward.2} parent=0 // pred_region
    _
  $region41: #{forward.2} parent=0 // pred_fallthru
    _
  // Predicated region
  $region42: #{forward.2} parent=0 // pred_check
    _
  $region43: #{forward.2} parent=0 // pred_check_branch
    %89 = sbr.rel (0) target = $region45
  $region44: #{forward.2} parent=0 // pred_region
    _
  $region45: #{forward.2} parent=0 // pred_fallthru
    _
  // Predicated region
  $region46: #{forward.2} parent=0 // pred_check
    _
  $region47: #{forward.2} parent=0 // pred_check_branch
    %91 = sbr.rel (0) target = $region49
  $region48: #{forward.2} parent=0 // pred_region
    _
  $region49: #{forward.2} parent=0 // pred_fallthru
    _

// kernel: forward.3
$region0: #{forward.3}
  #allocation0 [shape = 'u32[]', space=smem, size = 0x4, offset = 0x4, fixed_abs, tag = 'smem constant byte address 0x4 - core index']
  #allocation1 [shape = 'u32[72,128]{1,0:T(1,128)}', space=vmem, size = 0x9000, scoped, tag = 'internal scratch']
  #allocation2 [shape = 's32[1]{0:T(128)S(6)}', space=smem, size = 0x200, scoped, tag = 'scoped memory for forward.3']
  %s0 = inlined_call_operand.<no memory space> [shape: s32[1], index: 0, kind: input, shape index: {}]
  %s1 = inlined_call_operand.vmem [shape: f32[8,1], index: 1, kind: input, shape index: {}]
  %s2 = inlined_call_operand.vmem [shape: f32[1,8], index: 2, kind: input, shape index: {}]
  %s3 = inlined_call_operand.vmem [shape: f32[8,8], index: 3, kind: input, shape index: {}]
  %s4 = inlined_call_operand.vmem [shape: f32[8,8], index: 4, kind: input, shape index: {}]
  %s5 = inlined_call_operand.hbm [shape: f32[1,1], index: 5, kind: output, shape index: {}]
  %s6 = sld [smem:[#allocation0]]
  $region30: #{forward.3} parent=0
    _
  %s8 = ssub.s32 1, %s6
  %s9 = scalar_select 0, %s8, %s6
  %10 = sst [smem:[#allocation2]] %s0
  $region1: #{forward.3} parent=0
    #allocation3 [shape = 'u8[512]{0}', space=vmem, size = 0x400, scoped, tag = 'output window, operand 0, single buffered']
    #allocation4 [shape = 's32[1]{0}', space=sflag, size = 0x4, scoped, tag = 'scoped memory for forward.3']
    %11 = vsyncpa [#allocation4], 0
    // Predicated region
    $region2: #{forward.3} parent=1 // pred_check
      _
    $region3: #{forward.3} parent=1 // pred_check_branch
      %13 = sbr.rel (0) target = $region5
    $region4: #{forward.3} parent=1 // pred_region
      _
    $region5: #{forward.3} parent=1 // pred_fallthru
      _
    // Predicated region
    $region6: #{forward.3} parent=1 // pred_check
      _
    $region7: #{forward.3} parent=1 // pred_check_branch
      %15 = sbr.rel (0) target = $region9
    $region8: #{forward.3} parent=1 // pred_region
      _
    $region9: #{forward.3} parent=1 // pred_fallthru
      _
    // Predicated region
    $region10: #{forward.3} parent=1 // pred_check
      _
    $region11: #{forward.3} parent=1 // pred_check_branch
      %17 = sbr.rel (0) target = $region13
    $region12: #{forward.3} parent=1 // pred_region
      _
    $region13: #{forward.3} parent=1 // pred_fallthru
      _
    // Predicated region
    $region14: #{forward.3} parent=1 // pred_check
      _
    $region15: #{forward.3} parent=1 // pred_check_branch
      %19 = sbr.rel (0) target = $region17
    $region16: #{forward.3} parent=1 // pred_region
      _
    $region17: #{forward.3} parent=1 // pred_fallthru
      _
    // Predicated region
    $region18: #{forward.3} parent=1 // pred_check
      _
    $region19: #{forward.3} parent=1 // pred_check_branch
      %21 = sbr.rel (0) target = $region21
    $region20: #{forward.3} parent=1 // pred_region
      _
    $region21: #{forward.3} parent=1 // pred_fallthru
      _
    %s22 = sld [smem:[#allocation2]]
    %v23 = vld [vmem:[%s1] sm:$0xff]
    %v24 = vmul.f32 %v23, 100.0
    %v25 = vld [vmem:[%s3] sm:$0xff]
    %v26 = vadd.f32 %v25, 0.2
    %v27 = vmul.f32 %v26, 100.0
    %v28 = vlaneseq
    %v29 = vand.u32 %v28, 127
    %v30 = vstv %s22
    %vm31 = vcmp.lt.s32.totalorder %v29, %v30
    %v32 = vsel %vm31, %v27, -1e+30
    %vm33 = vcmask 64512
    %v34 = vsel %vm33, %v32, -inf
    %35 = vmax.xlane.f32.xlu0 %v34
    %v36 = vpop.xlane.xlu0 %35
    %v37 = vmax.f32 %v36, %v24
    %v38 = vsub.f32 %v24, %v37
    %v39 = vmul.f32 %v38, 1.442695
    %v40 = vpow.pop %v39
    %42 = vset.pattern.permute.xlu0 0
    %43 = vperm.xlu0 %42, %v37
    %v44 = vpop.permute.xlu0 %43
    %v46 = vsub.f32 %v32, %v44
    %v47 = vmul.f32 %v46, 1.442695
    %v48 = vpow.pop %v47
    %v49 = vsel %vm33, %v48, 0.0
    %50 = vadd.xlane.f32.xlu0 %v49
    %v51 = vpop.xlane.xlu0 %50
    %v52 = vadd.f32 %v40, %v51
    %v53 = vlog2.pop %v52
    %v54 = vmul.f32 %v53, 0.6931472
    %v55 = vadd.f32 %v37, %v54
    %v56 = vsub.f32 %v55, %v24
    %vm57 = vcmask 7168
    %v58 = vsel %vm57, %v56, 0.0
    %v59 = vrot.slane %v58, 4
    %v60 = vadd.f32 %v58, %v59
    %v61 = vrot.slane %v60, 2
    %v62 = vadd.f32 %v60, %v61
    %v63 = vrot.slane %v62, 1
    %v64 = vadd.f32 %v62, %v63
    %v65 = vld [vmem:[%s2] sm:$0x1]
    %v66 = vmul.f32 %v65, 100.0
    %v67 = vld [vmem:[%s4] sm:$0xff]
    %v68 = vadd.f32 %v67, 0.2
    %v69 = vmul.f32 %v68, 100.0
    %v70 = vlaneseq
    %v71 = vshrl.u32 %v70, 7
    %vm72 = vcmp.lt.s32.totalorder %v71, %v30
    %v73 = vsel %vm72, %v69, -1e+30
    %v74 = vsel %vm33, %v73, -inf
    %v75 = vrot.slane %v74, 4
    %v76 = vmax.f32 %v74, %v75
    %v77 = vrot.slane %v76, 2
    %v78 = vmax.f32 %v76, %v77
    %v79 = vrot.slane %v78, 1
    %v80 = vmax.f32 %v78, %v79
    %v81 = vmax.f32 %v80, %v66
    %v82 = vsub.f32 %v66, %v81
    %v83 = vmul.f32 %v82, 1.442695
    %v84 = vpow.pop %v83
    %v85 = vperm.slane %v81, 0
    %v86 = vsub.f32 %v73, %v85
    %v87 = vmul.f32 %v86, 1.442695
    %v88 = vpow.pop %v87
    %v89 = vsel %vm33, %v88, 0.0
    %v90 = vrot.slane %v89, 4
    %v91 = vadd.f32 %v89, %v90
    %v92 = vrot.slane %v91, 2
    %v93 = vadd.f32 %v91, %v92
    %v94 = vrot.slane %v93, 1
    %v95 = vadd.f32 %v93, %v94
    %v96 = vadd.f32 %v84, %v95
    %v97 = vlog2.pop %v96
    %v98 = vmul.f32 %v97, 0.6931472
    %v99 = vadd.f32 %v81, %v98
    %v100 = vsub.f32 %v99, %v66
    %vm101 = vcmask 57344
    %v102 = vsel %vm101, %v100, 0.0
    %103 = vadd.xlane.f32.xlu0 %v102
    %v104 = vpop.xlane.xlu0 %103
    %v105 = vadd.f32 %v64, %v104
    %v106 = vrcp.pop 16.0
    %v107 = vmul.f32 16.0, %v106
    %v108 = vsub.f32 1.0, %v107
    %v109 = vmul.f32 %v106, %v108
    %v110 = vadd.f32 %v106, %v109
    %vm111 = vweird.f32 %v106
    %v112 = vsel %vm111, %v106, %v110
    %v113 = vmul.f32 %v105, %v112
    %vm114 = vcmask 0
    %115 = vst.msk [vmem:[#allocation3] sm:$0x1] %vm114, %v113
    // Predicated region
    $region22: #{forward.3} parent=1 // pred_check
      _
    $region23: #{forward.3} parent=1 // pred_check_branch
      %117 = sbr.rel (0) target = $region25
    $region24: #{forward.3} parent=1 // pred_region
      %119 = vsyncadd [#allocation4], 0
      %s121 = sshll.u32 [#allocation3], 4
      %s122 = int_to_ptr.vmem [resolvable:$true] %s121
      %s123 = sshll.u32 %s5, 4
      %s124 = int_to_ptr.hbm [resolvable:$true] %s123
      %126 = dma.vmem_to_hbm [thread:$0]  %s122, 16, %s124, [#allocation4]
    $region25: #{forward.3} parent=1 // pred_fallthru
      _
    // Predicated region
    $region26: #{forward.3} parent=1 // pred_check
      _
    $region27: #{forward.3} parent=1 // pred_check_branch
      %128 = sbr.rel (0) target = $region29
    $region28: #{forward.3} parent=1 // pred_region
      %130 = dma.done [#allocation4], 16
    $region29: #{forward.3} parent=1 // pred_fallthru
      _
    %131 = vsyncpa [#allocation4], 1

</llo_original>
